<compile_context>
chip_gen: v5e
topology: v5e:2x2
jax: 0.10.0
libtpu: 0.0.40
codegen_flags: <defaults>
</compile_context>

<pallas_src>
import functools

import jax
import jax.numpy as jnp
from jax.experimental import pallas as pl
from jax.experimental.pallas import tpu as pltpu


def _round_up(a, b):
    return ((a + b - 1) // b) * b


def _gap_kernel(x_ref, o_ref, acc_ref, *, hw, tk, inv_hw, need_mask):
    # x_ref: (TR, TK) input tile of the flattened (rows, HW) view.
    # o_ref: (1, TR) lane-dense output block (resident across the k axis).
    # acc_ref: (TR, 128) f32 accumulator scratch, persists across k.
    k = pl.program_id(1)
    tr = acc_ref.shape[0]

    @pl.when(k == 0)
    def _():
        acc_ref[...] = jnp.zeros_like(acc_ref)

    if need_mask:
        # Lane index within a 128-wide slice; reused for every slice below.
        lane = jax.lax.broadcasted_iota(jnp.int32, (tr, 128), 1)
        base = k * tk  # first HW column covered by this block (traced scalar)

    # Per-step work stays on the VPU: fold the TK columns into a 128-wide
    # partial-sum slab using lane-aligned static ref slices (no (TR, TK) f32
    # temporary, no cross-lane reduce per step).
    partial = jnp.zeros((tr, 128), jnp.float32)
    for j in range(tk // 128):
        xj = x_ref[:, j * 128:(j + 1) * 128].astype(jnp.float32)
        if need_mask:
            # Zero out columns past the true HW extent (stale VMEM otherwise).
            xj = jnp.where(lane < (hw - base - j * 128), xj, 0.0)
        partial = partial + xj
    acc_ref[...] += partial

    # One cross-lane reduction + scale + relayout + cast at the last k step.
    @pl.when(k == pl.num_programs(1) - 1)
    def _():
        mean_col = jnp.sum(acc_ref[...], axis=-1, keepdims=True) * inv_hw
        o_ref[...] = jnp.transpose(mean_col).astype(o_ref.dtype)  # (1, TR)


def global_avg_pool(x, *, max_tk=4096, max_tr=2048,
                    target_buf_bytes=4 * 1024 * 1024):
    """x: (N, C, H, W) -> (N, C), mean over all spatial positions."""
    n, c, h, w = x.shape
    rows = n * c
    hw = h * w

    # Reduction-axis tile: lane-aligned, up to max_tk columns.
    tk = min(max_tk, _round_up(hw, 128))

    # Row tile: as large as the ~4 MiB in-flight buffer budget allows (fewer
    # grid steps -> less per-step overhead); multiple of 128 whenever the row
    # axis is actually tiled so the lane-dense output block stays legal.
    tr_cap = max(256, target_buf_bytes // (tk * 4))
    tr_cap = min(_round_up(tr_cap, 128), max_tr)
    if rows > tr_cap:
        tr = tr_cap
    elif rows >= 256:
        # Carve the row axis into >=2 blocks so both TensorCores on a v7x
        # chip get work from the "parallel" grid axis.
        tr = _round_up((rows + 1) // 2, 128)
    else:
        # Single row block covering the full dim (always a legal BlockSpec).
        # TODO(synk): for tiny N*C on v7x one core idles; splitting the HW
        # axis across cores with per-core partial sums would recover it.
        tr = rows

    grid_r = pl.cdiv(rows, tr)
    grid_k = pl.cdiv(hw, tk)
    rows_out = grid_r * tr

    x_flat = x.reshape(rows, hw)  # contiguous reshape: no copy, no pad pass
    need_mask = (hw % tk) != 0    # only then can a block hold invalid lanes

    kernel = functools.partial(_gap_kernel, hw=hw, tk=tk,
                               inv_hw=float(1.0 / hw), need_mask=need_mask)

    out = pl.pallas_call(
        kernel,
        out_shape=jax.ShapeDtypeStruct((1, rows_out), x.dtype),
        grid_spec=pltpu.PrefetchScalarGridSpec(
            num_scalar_prefetch=0,
            grid=(grid_r, grid_k),
            in_specs=[
                # Default double-buffering; bump to pipeline_mode=pl.Buffered(3)
                # only if a trace shows exposed DMA gaps between k steps.
                pl.BlockSpec((tr, tk), lambda r, k: (r, k)),
            ],
            out_specs=pl.BlockSpec((1, tr), lambda r, k: (0, r)),
            scratch_shapes=[pltpu.VMEM((tr, 128), jnp.float32)],
        ),
        compiler_params=pltpu.CompilerParams(
            dimension_semantics=("parallel", "arbitrary"),
            # Worst case ~8.2 MiB in flight (2 x 4 MiB input double-buffer +
            # accumulator + output block); 32 MiB is within every
            # generation's scoped/physical VMEM budget.
            vmem_limit_bytes=32 * 1024 * 1024,
        ),
    )(x_flat)

    return out[0, :rows].reshape(n, c)


if __name__ == "__main__":
    key = jax.random.PRNGKey(0)
    k1, k2 = jax.random.split(key)

    # Small NCHW input consistent with the module's forward.
    x = jax.random.normal(k1, (2, 4, 16, 16), dtype=jnp.float32)
    out = jax.block_until_ready(global_avg_pool(x))
    ref = x.reshape(x.shape[0], x.shape[1], -1).mean(axis=2)
    assert out.shape == (2, 4)
    assert jnp.allclose(out, ref, atol=1e-5, rtol=1e-5)

    # Ragged spatial size (HW=49): exercises the in-kernel tail mask that
    # replaced the jnp.pad pass.
    x2 = jax.random.normal(k2, (2, 3, 7, 7), dtype=jnp.float32)
    out2 = jax.block_until_ready(global_avg_pool(x2))
    ref2 = x2.reshape(x2.shape[0], x2.shape[1], -1).mean(axis=2)
    assert out2.shape == (2, 3)
    assert jnp.allclose(out2, ref2, atol=1e-5, rtol=1e-5)

    print("KERNEL_OK")
</pallas_src>

<mosaic_0001>
module attributes {stable_mosaic.version = 11 : i64} {
  func.func @_gap_kernel(%arg0: i32, %arg1: i32, %arg2: memref<8x256xf32, #tpu.memory_space<vmem>>, %arg3: memref<1x8xf32, #tpu.memory_space<vmem>>, %arg4: memref<8x128xf32, #tpu.memory_space<vmem>>) attributes {dimension_semantics = [#tpu.dimension_semantics<parallel>, #tpu.dimension_semantics<arbitrary>], iteration_bounds = array<i64: 1, 1>, scalar_prefetch = 0 : i64, scratch_operands = 1 : i64, tpu.core_type = #tpu.core_type<tc>, window_params = [{transform_indices = @transform_0, window_bounds = array<i64: 8, 256>}, {transform_indices = @transform_1, window_bounds = array<i64: 1, 8>}]} {
    %c0_i32 = arith.constant 0 : i32
    %0 = arith.cmpi eq, %arg1, %c0_i32 : i32
    %1 = arith.extui %0 : i1 to i32
    %c0_i32_0 = arith.constant 0 : i32
    %2 = arith.cmpi ne, %1, %c0_i32_0 : i32
    scf.if %2 {
      %cst_9 = arith.constant 0.000000e+00 : f32
      %14 = vector.broadcast %cst_9 : f32 to vector<8x128xf32>
      %c0_10 = arith.constant 0 : index
      %c0_11 = arith.constant 0 : index
      %15 = vector.load %arg4[%c0_10, %c0_11] : memref<8x128xf32, #tpu.memory_space<vmem>>, vector<8x128xf32>
      tpu.vector_store %arg4[%c0_10, %c0_11], %14 {strides = array<i32>} : memref<8x128xf32, #tpu.memory_space<vmem>>, vector<8x128xf32>,
    } else {
    }
    %cst = arith.constant 0.000000e+00 : f32
    %3 = vector.broadcast %cst : f32 to vector<8x128xf32>
    %c0 = arith.constant 0 : index
    %c0_1 = arith.constant 0 : index
    %4 = vector.load %arg2[%c0, %c0_1] : memref<8x256xf32, #tpu.memory_space<vmem>>, vector<8x128xf32>
    %5 = arith.addf %3, %4 : vector<8x128xf32>
    %c0_2 = arith.constant 0 : index
    %c128 = arith.constant 128 : index
    %6 = vector.load %arg2[%c0_2, %c128] : memref<8x256xf32, #tpu.memory_space<vmem>>, vector<8x128xf32>
    %7 = arith.addf %5, %6 : vector<8x128xf32>
    %c0_3 = arith.constant 0 : index
    %c0_4 = arith.constant 0 : index
    %8 = vector.load %arg4[%c0_3, %c0_4] : memref<8x128xf32, #tpu.memory_space<vmem>>, vector<8x128xf32>
    %9 = arith.addf %8, %7 : vector<8x128xf32>
    %c0_5 = arith.constant 0 : index
    %c0_6 = arith.constant 0 : index
    %10 = vector.load %arg4[%c0_5, %c0_6] : memref<8x128xf32, #tpu.memory_space<vmem>>, vector<8x128xf32>
    tpu.vector_store %arg4[%c0_5, %c0_6], %9 {strides = array<i32>} : memref<8x128xf32, #tpu.memory_space<vmem>>, vector<8x128xf32>,
    %c0_i32_7 = arith.constant 0 : i32
    %11 = arith.cmpi eq, %arg1, %c0_i32_7 : i32
    %12 = arith.extui %11 : i1 to i32
    %c0_i32_8 = arith.constant 0 : i32
    %13 = arith.cmpi ne, %12, %c0_i32_8 : i32
    scf.if %13 {
      %c0_9 = arith.constant 0 : index
      %c0_10 = arith.constant 0 : index
      %14 = vector.load %arg4[%c0_9, %c0_10] : memref<8x128xf32, #tpu.memory_space<vmem>>, vector<8x128xf32>
      %cst_11 = arith.constant dense<0.000000e+00> : vector<8xf32>
      %15 = vector.multi_reduction <add>, %14, %cst_11 [1] : vector<8x128xf32> to vector<8xf32>
      %16 = vector.shape_cast %15 : vector<8xf32> to vector<8x1xf32>
      %cst_12 = arith.constant 3.906250e-03 : f32
      %17 = vector.broadcast %cst_12 : f32 to vector<8x1xf32>
      %18 = arith.mulf %16, %17 : vector<8x1xf32>
      %19 = tpu.transpose %18, [1, 0] : vector<8x1xf32> -> vector<1x8xf32>
      %c0_13 = arith.constant 0 : index
      %c0_14 = arith.constant 0 : index
      %20 = vector.load %arg3[%c0_13, %c0_14] : memref<1x8xf32, #tpu.memory_space<vmem>>, vector<1x8xf32>
      tpu.vector_store %arg3[%c0_13, %c0_14], %19 {strides = array<i32>} : memref<1x8xf32, #tpu.memory_space<vmem>>, vector<1x8xf32>,
    } else {
    }
    return
  }
  func.func @transform_0(%arg0: i32, %arg1: i32) -> (i32, i32) {
    %c0_i32 = arith.constant 0 : i32
    return %arg0, %arg1 : i32, i32
  }
  func.func @transform_1(%arg0: i32, %arg1: i32) -> (i32, i32) {
    %c0_i32 = arith.constant 0 : i32
    %c0_i32_0 = arith.constant 0 : i32
    return %c0_i32, %arg0 : i32, i32
  }
}

</mosaic_0001>

<llo_original>
// kernel: tpu_custom_call.1
$region0: #{tpu_custom_call.1}
  #allocation0 [shape = 'u32[]', space=smem, size = 0x4, offset = 0x4, fixed_abs, tag = 'smem constant byte address 0x4 - core index']
  #allocation1 [shape = 'u32[72,128]{1,0:T(1,128)}', space=vmem, size = 0x9000, scoped, tag = 'internal scratch']
  #allocation2 [shape = 'f32[8,128]{1,0:T(8,128)}', space=vmem, size = 0x1000, scoped, tag = 'scratch operand']
  %s0 = inlined_call_operand.hbm [shape: f32[8,256], index: 0, kind: input, shape index: {}]
  %s1 = inlined_call_operand.hbm [shape: f32[1,8], index: 1, kind: output, shape index: {}]
  %s2 = sld [smem:[#allocation0]]
  $region26: #{tpu_custom_call.1} parent=0
    _
  %s4 = ssub.s32 1, %s2
  %s5 = scalar_select 0, %s4, %s2
  $region1: #{tpu_custom_call.1} parent=0
    #allocation3 [shape = 'u8[8192]{0}', space=vmem, size = 0x2000, scoped, tag = 'input window, operand 0, single buffered']
    #allocation4 [shape = 's32[1]{0}', space=sflag, size = 0x4, scoped, tag = 'scoped memory for tpu_custom_call.1']
    #allocation5 [shape = 's32[1]{0}', space=sflag, size = 0x4, scoped, tag = 'scoped memory for tpu_custom_call.1']
    #allocation6 [shape = 'u8[512]{0}', space=vmem, size = 0x400, scoped, tag = 'output window, operand 0, single buffered']
    %6 = vsyncpa [#allocation4], 0
    %7 = vsyncpa [#allocation5], 0
    // Predicated region
    $region2: #{tpu_custom_call.1} parent=1 // pred_check
      _
    $region3: #{tpu_custom_call.1} parent=1 // pred_check_branch
      %9 = sbr.rel (0) target = $region5
    $region4: #{tpu_custom_call.1} parent=1 // pred_region
      %11 = vsyncadd [#allocation4], 0
      %s13 = sshll.u32 %s0, 4
      %s14 = int_to_ptr.hbm [resolvable:$true] %s13
      %s15 = sshll.u32 [#allocation3], 4
      %s16 = int_to_ptr.vmem [resolvable:$true] %s15
      %18 = dma.hbm_to_vmem [thread:$0]  %s14, 256, %s16, [#allocation4]
    $region5: #{tpu_custom_call.1} parent=1 // pred_fallthru
      _
    // Predicated region
    $region6: #{tpu_custom_call.1} parent=1 // pred_check
      _
    $region7: #{tpu_custom_call.1} parent=1 // pred_check_branch
      %20 = sbr.rel (0) target = $region9
    $region8: #{tpu_custom_call.1} parent=1 // pred_region
      %22 = dma.done [#allocation4], 256
    $region9: #{tpu_custom_call.1} parent=1 // pred_fallthru
      _
    %p23 = scmp.eq.s32.totalorder 0, 0
    // Predicated region
    $region10: #{tpu_custom_call.1} parent=1 // pred_check
      %p24 = pneg %p23
    $region11: #{tpu_custom_call.1} parent=1 // pred_check_branch
      %26 = sbr.rel (%p24) target = $region13
    $region12: #{tpu_custom_call.1} parent=1 // pred_region
      %27 = vst [vmem:[#allocation2] sm:$0xff] 0.0
    $region13: #{tpu_custom_call.1} parent=1 // pred_fallthru
      _
    %v28 = vld [vmem:[#allocation3] sm:$0xff]
    %v29 = vadd.f32 %v28, 0.0
    %v30 = vld [vmem:[#allocation3 + $0x8] sm:$0xff]
    %v31 = vadd.f32 %v29, %v30
    %v32 = vld [vmem:[#allocation2] sm:$0xff]
    %v33 = vadd.f32 %v32, %v31
    %34 = vst [vmem:[#allocation2] sm:$0xff] %v33
    // Predicated region
    $region14: #{tpu_custom_call.1} parent=1 // pred_check
      %p35 = pneg %p23
    $region15: #{tpu_custom_call.1} parent=1 // pred_check_branch
      %37 = sbr.rel (%p35) target = $region17
    $region16: #{tpu_custom_call.1} parent=1 // pred_region
      %v38 = vld [vmem:[#allocation2] sm:$0xff]
      %39 = vadd.xlane.f32.xlu0 %v38
      %v40 = vpop.xlane.xlu0 %39
      %v41 = vmul.f32 %v40, 0.00390625
      %42 = vxpose.xlu0.b32.start [1/16] %v41, 128
      %43 = vxpose.xlu0.b32.cont [2/16] 0.0, 128
      %44 = vxpose.xlu0.b32.cont [3/16] 0.0, 128
      %45 = vxpose.xlu0.b32.cont [4/16] 0.0, 128
      %46 = vxpose.xlu0.b32.cont [5/16] 0.0, 128
      %47 = vxpose.xlu0.b32.cont [6/16] 0.0, 128
      %48 = vxpose.xlu0.b32.cont [7/16] 0.0, 128
      %49 = vxpose.xlu0.b32.cont [8/16] 0.0, 128
      %50 = vxpose.xlu0.b32.cont [9/16] 0.0, 128
      %51 = vxpose.xlu0.b32.cont [10/16] 0.0, 128
      %52 = vxpose.xlu0.b32.cont [11/16] 0.0, 128
      %53 = vxpose.xlu0.b32.cont [12/16] 0.0, 128
      %54 = vxpose.xlu0.b32.cont [13/16] 0.0, 128
      %55 = vxpose.xlu0.b32.cont [14/16] 0.0, 128
      %56 = vxpose.xlu0.b32.cont [15/16] 0.0, 128
      %57 = vxpose.xlu0.b32.end [16/16] 0.0, 128
      %v58 = vpop.trf.xlu0
      %v59 = vpop.trf.xlu0
      %v60 = vpop.trf.xlu0
      %v61 = vpop.trf.xlu0
      %v62 = vpop.trf.xlu0
      %v63 = vpop.trf.xlu0
      %v64 = vpop.trf.xlu0
      %v65 = vpop.trf.xlu0
      %v66 = vpop.trf.xlu0
      %v67 = vpop.trf.xlu0
      %v68 = vpop.trf.xlu0
      %v69 = vpop.trf.xlu0
      %v70 = vpop.trf.xlu0
      %v71 = vpop.trf.xlu0
      %v72 = vpop.trf.xlu0
      %v73 = vpop.trf.xlu0
      %vm74 = vcmask 57344
      %75 = vst.msk [vmem:[#allocation6] sm:$0x1] %vm74, %v58
    $region17: #{tpu_custom_call.1} parent=1 // pred_fallthru
      _
    // Predicated region
    $region18: #{tpu_custom_call.1} parent=1 // pred_check
      _
    $region19: #{tpu_custom_call.1} parent=1 // pred_check_branch
      %77 = sbr.rel (0) target = $region21
    $region20: #{tpu_custom_call.1} parent=1 // pred_region
      %79 = vsyncadd [#allocation5], 0
      %s81 = sshll.u32 [#allocation6], 4
      %s82 = int_to_ptr.vmem [resolvable:$true] %s81
      %s83 = sshll.u32 %s1, 4
      %s84 = int_to_ptr.hbm [resolvable:$true] %s83
      %86 = dma.vmem_to_hbm [thread:$0]  %s82, 16, %s84, [#allocation5]
    $region21: #{tpu_custom_call.1} parent=1 // pred_fallthru
      _
    // Predicated region
    $region22: #{tpu_custom_call.1} parent=1 // pred_check
      _
    $region23: #{tpu_custom_call.1} parent=1 // pred_check_branch
      %88 = sbr.rel (0) target = $region25
    $region24: #{tpu_custom_call.1} parent=1 // pred_region
      %90 = dma.done [#allocation5], 16
    $region25: #{tpu_custom_call.1} parent=1 // pred_fallthru
      _
    %91 = vsyncpa [#allocation4], 1
    %92 = vsyncpa [#allocation5], 1

</llo_original>
